<compile_context>
chip_gen: v7x
topology: tpu7x:2x2x1
jax: 0.10.0
libtpu: 0.0.40
codegen_flags: <defaults>
</compile_context>

<pallas_src>
import functools
import math

import jax
import jax.numpy as jnp
from jax.experimental import pallas as pl
from jax.experimental.pallas import tpu as pltpu

IN_FEATURES = 500
LANE = 128
SUBLANE = 8


def _round_up(x, m):
    return ((x + m - 1) // m) * m


def _linear_kernel(x_ref, w_ref, b_ref, o_ref):
    # x_ref: (TM, K) f32 ; w_ref: (K, C_pad) bf16 ; b_ref: (1, C_pad) f32
    # o_ref: (TM, C_pad) f32
    x = x_ref[...].astype(w_ref.dtype)  # bf16 operands -> fewer MXU passes
    acc = jnp.dot(x, w_ref[...], preferred_element_type=jnp.float32)
    o_ref[...] = (acc + b_ref[...]).astype(o_ref.dtype)


@functools.partial(jax.jit, static_argnames=("n_classes", "block_m"))
def fiannaca2018_head(x, w_t_pad, b_pad, *, n_classes, block_m=512):
    """x: (B, 500); w_t_pad: (500, C_pad); b_pad: (1, C_pad) -> (B, n_classes)."""
    B, K = x.shape
    Kw, C_pad = w_t_pad.shape
    assert K == IN_FEATURES and Kw == IN_FEATURES, (
        "Fiannaca2018Head expects 500 input features"
    )
    assert C_pad % LANE == 0 and C_pad >= n_classes

    # Batch tile: multiple of 8 sublanes, capped at block_m.  Small batches run
    # in one grid step; large batches are streamed and auto-pipelined.
    tm = min(_round_up(B, SUBLANE), block_m)
    b_padded = _round_up(B, tm)
    if b_padded != B:
        x = jnp.pad(x, ((0, b_padded - B), (0, 0)))

    out = pl.pallas_call(
        _linear_kernel,
        out_shape=jax.ShapeDtypeStruct((b_padded, C_pad), x.dtype),
        grid=(b_padded // tm,),
        in_specs=[
            pl.BlockSpec((tm, K), lambda i: (i, 0)),      # x: streamed over batch
            pl.BlockSpec((K, C_pad), lambda i: (0, 0)),   # weight: VMEM-resident
            pl.BlockSpec((1, C_pad), lambda i: (0, 0)),   # bias: VMEM-resident
        ],
        out_specs=pl.BlockSpec((tm, C_pad), lambda i: (i, 0)),
        compiler_params=pltpu.CompilerParams(
            dimension_semantics=("parallel",),  # megacore on v7x; neutral elsewhere
        ),
    )(x, w_t_pad, b_pad)
    return out[:B, :n_classes]


def init_params(key, n_classes, in_features=IN_FEATURES, param_dtype=jnp.bfloat16):
    """Deterministic init mimicking PyTorch nn.Linear defaults
    (kaiming-uniform weight, uniform bias, bound = 1/sqrt(fan_in)).

    Returns the weight pre-transposed and zero-padded to a lane-dense
    (128-multiple) output width, plus the original f32 weight/bias for
    reference checking.
    """
    kw, kb = jax.random.split(key)
    bound = 1.0 / math.sqrt(in_features)
    weight = jax.random.uniform(
        kw, (n_classes, in_features), dtype=jnp.float32, minval=-bound, maxval=bound
    )
    bias = jax.random.uniform(
        kb, (n_classes,), dtype=jnp.float32, minval=-bound, maxval=bound
    )

    c_pad = _round_up(n_classes, LANE)
    w_t_pad = jnp.zeros((in_features, c_pad), dtype=param_dtype)
    w_t_pad = w_t_pad.at[:, :n_classes].set(weight.T.astype(param_dtype))
    b_pad = jnp.zeros((1, c_pad), dtype=jnp.float32)
    b_pad = b_pad.at[:, :n_classes].set(bias)
    return w_t_pad, b_pad, weight, bias


if __name__ == "__main__":
    key = jax.random.PRNGKey(0)
    k_x, k_p = jax.random.split(key)

    batch = 8
    n_classes = 10

    x = jax.random.normal(k_x, (batch, IN_FEATURES), dtype=jnp.float32)
    w_t_pad, b_pad, weight, bias = init_params(k_p, n_classes)

    out = fiannaca2018_head(x, w_t_pad, b_pad, n_classes=n_classes)
    out = jax.block_until_ready(out)

    assert out.shape == (batch, n_classes)

    # f32 reference (PyTorch semantics). bf16 MXU operands with f32 accumulate
    # stay within a few 1e-3 of it for a K=500 contraction.
    ref = x @ weight.T + bias
    assert jnp.allclose(out, ref, atol=3e-2, rtol=3e-2), float(
        jnp.max(jnp.abs(out - ref))
    )

    print("KERNEL_OK")
</pallas_src>

<mosaic_0001>
module attributes {stable_mosaic.version = 11 : i64} {
  func.func @_linear_kernel(%arg0: i32, %arg1: memref<8x500xf32, #tpu.memory_space<vmem>>, %arg2: memref<500x128xbf16, #tpu.memory_space<vmem>>, %arg3: memref<1x128xf32, #tpu.memory_space<vmem>>, %arg4: memref<8x128xf32, #tpu.memory_space<vmem>>) attributes {dimension_semantics = [#tpu.dimension_semantics<parallel>], iteration_bounds = array<i64: 1>, scalar_prefetch = 0 : i64, scratch_operands = 0 : i64, tpu.core_type = #tpu.core_type<tc>, window_params = [{transform_indices = @transform_0, window_bounds = array<i64: 8, 500>}, {pipeline_mode = #tpu.pipeline_mode<synchronous>, transform_indices = @transform_1, window_bounds = array<i64: 500, 128>}, {pipeline_mode = #tpu.pipeline_mode<synchronous>, transform_indices = @transform_2, window_bounds = array<i64: 1, 128>}, {transform_indices = @transform_3, window_bounds = array<i64: 8, 128>}]} {
    %c0 = arith.constant 0 : index
    %c0_0 = arith.constant 0 : index
    %0 = vector.load %arg1[%c0, %c0_0] : memref<8x500xf32, #tpu.memory_space<vmem>>, vector<8x500xf32>
    %1 = arith.truncf %0 : vector<8x500xf32> to vector<8x500xbf16>
    %c0_1 = arith.constant 0 : index
    %c0_2 = arith.constant 0 : index
    %2 = vector.load %arg2[%c0_1, %c0_2] : memref<500x128xbf16, #tpu.memory_space<vmem>>, vector<500x128xbf16>
    %cst = arith.constant dense<0.000000e+00> : vector<8x128xf32>
    %3 = tpu.matmul %1, %2, %cst {dimension_numbers = #tpu.dot_dimension_numbers<[1], [0], [0], [1], [0, 0, 1, 1], [], []>} : vector<8x500xbf16>, vector<500x128xbf16>, vector<8x128xf32> -> vector<8x128xf32>
    %c0_3 = arith.constant 0 : index
    %c0_4 = arith.constant 0 : index
    %4 = vector.load %arg3[%c0_3, %c0_4] : memref<1x128xf32, #tpu.memory_space<vmem>>, vector<1x128xf32>
    %5 = vector.broadcast %4 : vector<1x128xf32> to vector<8x128xf32>
    %6 = arith.addf %3, %5 : vector<8x128xf32>
    %c0_5 = arith.constant 0 : index
    %c0_6 = arith.constant 0 : index
    %7 = vector.load %arg4[%c0_5, %c0_6] : memref<8x128xf32, #tpu.memory_space<vmem>>, vector<8x128xf32>
    tpu.vector_store %arg4[%c0_5, %c0_6], %6 {strides = array<i32>} : memref<8x128xf32, #tpu.memory_space<vmem>>, vector<8x128xf32>,
    return
  }
  func.func @transform_0(%arg0: i32) -> (i32, i32) {
    %c0_i32 = arith.constant 0 : i32
    %c0_i32_0 = arith.constant 0 : i32
    return %arg0, %c0_i32 : i32, i32
  }
  func.func @transform_1(%arg0: i32) -> (i32, i32) {
    %c0_i32 = arith.constant 0 : i32
    %c0_i32_0 = arith.constant 0 : i32
    %c0_i32_1 = arith.constant 0 : i32
    return %c0_i32, %c0_i32_0 : i32, i32
  }
  func.func @transform_2(%arg0: i32) -> (i32, i32) {
    %c0_i32 = arith.constant 0 : i32
    %c0_i32_0 = arith.constant 0 : i32
    %c0_i32_1 = arith.constant 0 : i32
    return %c0_i32, %c0_i32_0 : i32, i32
  }
  func.func @transform_3(%arg0: i32) -> (i32, i32) {
    %c0_i32 = arith.constant 0 : i32
    %c0_i32_0 = arith.constant 0 : i32
    return %arg0, %c0_i32 : i32, i32
  }
}

</mosaic_0001>

<llo_original>
// kernel: fiannaca2018_head.1
$region0: #{fiannaca2018_head.1}
  #allocation0 [shape = 'u32[]', space=smem, size = 0x4, offset = 0x4, fixed_abs, tag = 'smem constant byte address 0x4 - core index']
  #allocation1 [shape = 'u32[144,128]{1,0:T(1,128)}', space=vmem, size = 0x12000, scoped, tag = 'internal scratch']
  %s0 = inlined_call_operand.hbm [shape: f32[8,500], index: 0, kind: input, shape index: {}]
  %s1 = inlined_call_operand.hbm [shape: bf16[500,128], index: 1, kind: input, shape index: {}]
  %s2 = inlined_call_operand.vmem [shape: f32[1,128], index: 2, kind: input, shape index: {}]
  %s3 = inlined_call_operand.hbm [shape: f32[8,128], index: 3, kind: output, shape index: {}]
  %s4 = sld [smem:[#allocation0]]
  $region30: #{fiannaca2018_head.1} parent=0
    _
  %s6 = ssub.s32 1, %s4
  %s7 = scalar_select 0, %s6, %s4
  $region1: #{fiannaca2018_head.1} parent=0
    #allocation2 [shape = 'u8[16384]{0}', space=vmem, size = 0x4000, scoped, tag = 'input window, operand 0, single buffered']
    #allocation3 [shape = 's32[1]{0}', space=sflag, size = 0x4, scoped, tag = 'scoped memory for fiannaca2018_head.1']
    #allocation4 [shape = 's32[1]{0}', space=sflag, size = 0x4, scoped, tag = 'scoped memory for fiannaca2018_head.1']
    #allocation5 [shape = 'u8[129024]{0}', space=vmem, size = 0x1f800, scoped, tag = 'input window, operand 1, single buffered']
    #allocation6 [shape = 's32[1]{0}', space=sflag, size = 0x4, scoped, tag = 'scoped memory for fiannaca2018_head.1']
    #allocation7 [shape = 'u8[4096]{0}', space=vmem, size = 0x1000, scoped, tag = 'output window, operand 0, single buffered']
    %8 = vsyncpa [#allocation3], 0
    %9 = vsyncpa [#allocation6], 0
    %10 = vsyncpa [#allocation4], 0
    // Predicated region
    $region2: #{fiannaca2018_head.1} parent=1 // pred_check
      _
    $region3: #{fiannaca2018_head.1} parent=1 // pred_check_branch
      %12 = sbr.rel (0) target = $region5
    $region4: #{fiannaca2018_head.1} parent=1 // pred_region
      %s14 = ssub.s32 512, 512
      %15 = vsyncadd [#allocation3], %s14
      %s17 = sshll.u32 [#allocation2], 4
      %s18 = int_to_ptr.vmem [resolvable:$true] %s17
      %20 = dma.hbm_to_vmem [thread:$0]  %s0, 512, %s18, [#allocation3]
    $region5: #{fiannaca2018_head.1} parent=1 // pred_fallthru
      _
    // Predicated region
    $region6: #{fiannaca2018_head.1} parent=1 // pred_check
      _
    $region7: #{fiannaca2018_head.1} parent=1 // pred_check_branch
      %22 = sbr.rel (0) target = $region9
    $region8: #{fiannaca2018_head.1} parent=1 // pred_region
      %s24 = ssub.s32 4032, 4032
      %25 = vsyncadd [#allocation6], %s24
      %s26 = sshll.u32 [#allocation5], 4
      %s27 = int_to_ptr.vmem [resolvable:$true] %s26
      %32 = dma.hbm_to_vmem [thread:$0]  %s1, 4032, %s27, [#allocation6], 64, 64, 4
    $region9: #{fiannaca2018_head.1} parent=1 // pred_fallthru
      _
    // Predicated region
    $region10: #{fiannaca2018_head.1} parent=1 // pred_check
      _
    $region11: #{fiannaca2018_head.1} parent=1 // pred_check_branch
      %34 = sbr.rel (0) target = $region13
    $region12: #{fiannaca2018_head.1} parent=1 // pred_region
      _
    $region13: #{fiannaca2018_head.1} parent=1 // pred_fallthru
      _
    // Predicated region
    $region14: #{fiannaca2018_head.1} parent=1 // pred_check
      _
    $region15: #{fiannaca2018_head.1} parent=1 // pred_check_branch
      %36 = sbr.rel (0) target = $region17
    $region16: #{fiannaca2018_head.1} parent=1 // pred_region
      %37 = dma.done [#allocation3], 512
    $region17: #{fiannaca2018_head.1} parent=1 // pred_fallthru
      _
    // Predicated region
    $region18: #{fiannaca2018_head.1} parent=1 // pred_check
      _
    $region19: #{fiannaca2018_head.1} parent=1 // pred_check_branch
      %39 = sbr.rel (0) target = $region21
    $region20: #{fiannaca2018_head.1} parent=1 // pred_region
      %40 = dma.done [#allocation6], 4032
    $region21: #{fiannaca2018_head.1} parent=1 // pred_fallthru
      _
    %v42 = vld [vmem:[#allocation2] sm:$0xff]
    %v43 = vld [vmem:[#allocation2 + $0x8] sm:$0xff]
    %v44 = vld [vmem:[#allocation2 + $0x10] sm:$0xff]
    %v45 = vld [vmem:[#allocation2 + $0x18] sm:$0xff]
    %v46 = vpack.c.bf16 %v42, %v42
    %v47 = vpack.c.bf16 %v43, %v43
    %v48 = vpack.c.bf16 %v44, %v44
    %v49 = vpack.c.bf16 %v45, %v45
    %v50 = vld [vmem:[#allocation5] sm:$0xf]
    %v51 = vld [vmem:[#allocation5 + $0x4] sm:$0xf]
    %v52 = vld [vmem:[#allocation5 + $0x8] sm:$0xf]
    %v53 = vld [vmem:[#allocation5 + $0xc] sm:$0xf]
    %v54 = vld [vmem:[#allocation5 + $0x10] sm:$0xf]
    %v55 = vld [vmem:[#allocation5 + $0x14] sm:$0xf]
    %v56 = vld [vmem:[#allocation5 + $0x18] sm:$0xf]
    %v57 = vld [vmem:[#allocation5 + $0x1c] sm:$0xf]
    %v58 = vld [vmem:[#allocation5 + $0x20] sm:$0xf]
    %v59 = vld [vmem:[#allocation5 + $0x24] sm:$0xf]
    %v60 = vld [vmem:[#allocation5 + $0x28] sm:$0xf]
    %v61 = vld [vmem:[#allocation5 + $0x2c] sm:$0xf]
    %v62 = vld [vmem:[#allocation5 + $0x30] sm:$0xf]
    %v63 = vld [vmem:[#allocation5 + $0x34] sm:$0xf]
    %v64 = vld [vmem:[#allocation5 + $0x38] sm:$0xf]
    %v65 = vld [vmem:[#allocation5 + $0x3c] sm:$0xf]
    %v66 = vld [vmem:[#allocation5 + $0x40] sm:$0xf]
    %v67 = vld [vmem:[#allocation5 + $0x44] sm:$0xf]
    %v68 = vld [vmem:[#allocation5 + $0x48] sm:$0xf]
    %v69 = vld [vmem:[#allocation5 + $0x4c] sm:$0xf]
    %v70 = vld [vmem:[#allocation5 + $0x50] sm:$0xf]
    %v71 = vld [vmem:[#allocation5 + $0x54] sm:$0xf]
    %v72 = vld [vmem:[#allocation5 + $0x58] sm:$0xf]
    %v73 = vld [vmem:[#allocation5 + $0x5c] sm:$0xf]
    %v74 = vld [vmem:[#allocation5 + $0x60] sm:$0xf]
    %v75 = vld [vmem:[#allocation5 + $0x64] sm:$0xf]
    %v76 = vld [vmem:[#allocation5 + $0x68] sm:$0xf]
    %v77 = vld [vmem:[#allocation5 + $0x6c] sm:$0xf]
    %v78 = vld [vmem:[#allocation5 + $0x70] sm:$0xf]
    %v79 = vld [vmem:[#allocation5 + $0x74] sm:$0xf]
    %v80 = vld [vmem:[#allocation5 + $0x78] sm:$0xf]
    %v81 = vld [vmem:[#allocation5 + $0x7c] sm:$0xf]
    %v82 = vld [vmem:[#allocation5 + $0x80] sm:$0xf]
    %v83 = vld [vmem:[#allocation5 + $0x84] sm:$0xf]
    %v84 = vld [vmem:[#allocation5 + $0x88] sm:$0xf]
    %v85 = vld [vmem:[#allocation5 + $0x8c] sm:$0xf]
    %v86 = vld [vmem:[#allocation5 + $0x90] sm:$0xf]
    %v87 = vld [vmem:[#allocation5 + $0x94] sm:$0xf]
    %v88 = vld [vmem:[#allocation5 + $0x98] sm:$0xf]
    %v89 = vld [vmem:[#allocation5 + $0x9c] sm:$0xf]
    %v90 = vld [vmem:[#allocation5 + $0xa0] sm:$0xf]
    %v91 = vld [vmem:[#allocation5 + $0xa4] sm:$0xf]
    %v92 = vld [vmem:[#allocation5 + $0xa8] sm:$0xf]
    %v93 = vld [vmem:[#allocation5 + $0xac] sm:$0xf]
    %v94 = vld [vmem:[#allocation5 + $0xb0] sm:$0xf]
    %v95 = vld [vmem:[#allocation5 + $0xb4] sm:$0xf]
    %v96 = vld [vmem:[#allocation5 + $0xb8] sm:$0xf]
    %v97 = vld [vmem:[#allocation5 + $0xbc] sm:$0xf]
    %v98 = vld [vmem:[#allocation5 + $0xc0] sm:$0xf]
    %v99 = vld [vmem:[#allocation5 + $0xc4] sm:$0xf]
    %v100 = vld [vmem:[#allocation5 + $0xc8] sm:$0xf]
    %v101 = vld [vmem:[#allocation5 + $0xcc] sm:$0xf]
    %v102 = vld [vmem:[#allocation5 + $0xd0] sm:$0xf]
    %v103 = vld [vmem:[#allocation5 + $0xd4] sm:$0xf]
    %v104 = vld [vmem:[#allocation5 + $0xd8] sm:$0xf]
    %v105 = vld [vmem:[#allocation5 + $0xdc] sm:$0xf]
    %v106 = vld [vmem:[#allocation5 + $0xe0] sm:$0xf]
    %v107 = vld [vmem:[#allocation5 + $0xe4] sm:$0xf]
    %v108 = vld [vmem:[#allocation5 + $0xe8] sm:$0xf]
    %v109 = vld [vmem:[#allocation5 + $0xec] sm:$0xf]
    %v110 = vld [vmem:[#allocation5 + $0xf0] sm:$0xf]
    %v111 = vld [vmem:[#allocation5 + $0xf4] sm:$0xf]
    %v112 = vld [vmem:[#allocation5 + $0xf8] sm:$0x3]
    %v113 = vld [vmem:[%s2] sm:$0x1]
    %v115 = vlaneseq
    %v116 = vshrl.u32 %v115, 7
    %v117 = vsub.s32 0, %v116
    %v118 = vrot.slane %v113, %v117
    %v183 = vunpack.c.l.b16 %v50
    %v184 = vunpack.c.l.b16 %v51
    %v185 = vunpack.c.l.b16 %v52
    %v186 = vunpack.c.l.b16 %v53
    %v187 = vunpack.c.l.b16 %v54
    %v188 = vunpack.c.l.b16 %v55
    %v189 = vunpack.c.l.b16 %v56
    %v190 = vunpack.c.l.b16 %v57
    %v191 = vunpack.c.l.b16 %v58
    %v192 = vunpack.c.l.b16 %v59
    %v193 = vunpack.c.l.b16 %v60
    %v194 = vunpack.c.l.b16 %v61
    %v195 = vunpack.c.l.b16 %v62
    %v196 = vunpack.c.l.b16 %v63
    %v197 = vunpack.c.l.b16 %v64
    %v198 = vunpack.c.l.b16 %v65
    %v199 = vunpack.c.l.b16 %v66
    %v200 = vunpack.c.l.b16 %v67
    %v201 = vunpack.c.l.b16 %v68
    %v202 = vunpack.c.l.b16 %v69
    %v203 = vunpack.c.l.b16 %v70
    %v204 = vunpack.c.l.b16 %v71
    %v205 = vunpack.c.l.b16 %v72
    %v206 = vunpack.c.l.b16 %v73
    %v207 = vunpack.c.l.b16 %v74
    %v208 = vunpack.c.l.b16 %v75
    %v209 = vunpack.c.l.b16 %v76
    %v210 = vunpack.c.l.b16 %v77
    %v211 = vunpack.c.l.b16 %v78
    %v212 = vunpack.c.l.b16 %v79
    %v213 = vunpack.c.l.b16 %v80
    %v214 = vunpack.c.l.b16 %v81
    %v215 = vunpack.c.l.b16 %v82
    %v216 = vunpack.c.l.b16 %v83
    %v217 = vunpack.c.l.b16 %v84
    %v218 = vunpack.c.l.b16 %v85
    %v219 = vunpack.c.l.b16 %v86
    %v220 = vunpack.c.l.b16 %v87
    %v221 = vunpack.c.l.b16 %v88
    %v222 = vunpack.c.l.b16 %v89
    %v223 = vunpack.c.l.b16 %v90
    %v224 = vunpack.c.l.b16 %v91
    %v225 = vunpack.c.l.b16 %v92
    %v226 = vunpack.c.l.b16 %v93
    %v227 = vunpack.c.l.b16 %v94
    %v228 = vunpack.c.l.b16 %v95
    %v229 = vunpack.c.l.b16 %v96
    %v230 = vunpack.c.l.b16 %v97
    %v231 = vunpack.c.l.b16 %v98
    %v232 = vunpack.c.l.b16 %v99
    %v233 = vunpack.c.l.b16 %v100
    %v234 = vunpack.c.l.b16 %v101
    %v235 = vunpack.c.l.b16 %v102
    %v236 = vunpack.c.l.b16 %v103
    %v237 = vunpack.c.l.b16 %v104
    %v238 = vunpack.c.l.b16 %v105
    %v239 = vunpack.c.l.b16 %v106
    %v240 = vunpack.c.l.b16 %v107
    %v241 = vunpack.c.l.b16 %v108
    %v242 = vunpack.c.l.b16 %v109
    %v243 = vunpack.c.l.b16 %v110
    %v244 = vunpack.c.l.b16 %v111
    %v245 = vunpack.c.l.b16 %v112
    %v246 = vpack.c.b16 %v184, %v183
    %v247 = vpack.c.b16 %v186, %v185
    %v248 = vpack.c.b16 %v188, %v187
    %v249 = vpack.c.b16 %v190, %v189
    %v250 = vpack.c.b16 %v192, %v191
    %v251 = vpack.c.b16 %v194, %v193
    %v252 = vpack.c.b16 %v196, %v195
    %v253 = vpack.c.b16 %v198, %v197
    %v254 = vpack.c.b16 %v200, %v199
    %v255 = vpack.c.b16 %v202, %v201
    %v256 = vpack.c.b16 %v204, %v203
    %v257 = vpack.c.b16 %v206, %v205
    %v258 = vpack.c.b16 %v208, %v207
    %v259 = vpack.c.b16 %v210, %v209
    %v260 = vpack.c.b16 %v212, %v211
    %v261 = vpack.c.b16 %v214, %v213
    %v262 = vpack.c.b16 %v216, %v215
    %v263 = vpack.c.b16 %v218, %v217
    %v264 = vpack.c.b16 %v220, %v219
    %v265 = vpack.c.b16 %v222, %v221
    %v266 = vpack.c.b16 %v224, %v223
    %v267 = vpack.c.b16 %v226, %v225
    %v268 = vpack.c.b16 %v228, %v227
    %v269 = vpack.c.b16 %v230, %v229
    %v270 = vpack.c.b16 %v232, %v231
    %v271 = vpack.c.b16 %v234, %v233
    %v272 = vpack.c.b16 %v236, %v235
    %v273 = vpack.c.b16 %v238, %v237
    %v274 = vpack.c.b16 %v240, %v239
    %v275 = vpack.c.b16 %v242, %v241
    %v276 = vpack.c.b16 %v244, %v243
    %v277 = vpack.c.b16 %v245, %v245
    %vm309 = vcmask 949248
    %v311 = vsel %vm309, %v49, 0
    %vm313 = vcmask 1041408
    %v315 = vsel %vm313, %v277, 0
    %317 = vmatprep.subr.bf16.mxu0 0
    %318 = vmatpush1.bf16.msra.mxu0 %v246
    %319 = vmatprep.subr.bf16.mxu0 0
    %320 = vmatpush1.bf16.msra.mxu0 %v247
    %321 = vmatprep.subr.bf16.mxu0 0
    %322 = vmatpush1.bf16.msra.mxu0 %v248
    %323 = vmatprep.subr.bf16.mxu0 0
    %324 = vmatpush1.bf16.msra.mxu0 %v249
    %325 = vmatprep.subr.bf16.mxu0 0
    %326 = vmatpush1.bf16.msra.mxu0 %v250
    %327 = vmatprep.subr.bf16.mxu0 0
    %328 = vmatpush1.bf16.msra.mxu0 %v251
    %329 = vmatprep.subr.bf16.mxu0 0
    %330 = vmatpush1.bf16.msra.mxu0 %v252
    %331 = vmatprep.subr.bf16.mxu0 0
    %332 = vmatpush1.bf16.msra.mxu0 %v253
    %333 = vmatprep.subr.bf16.mxu0 0
    %334 = vmatpush1.bf16.msra.mxu0 %v254
    %335 = vmatprep.subr.bf16.mxu0 0
    %336 = vmatpush1.bf16.msra.mxu0 %v255
    %337 = vmatprep.subr.bf16.mxu0 0
    %338 = vmatpush1.bf16.msra.mxu0 %v256
    %339 = vmatprep.subr.bf16.mxu0 0
    %340 = vmatpush1.bf16.msra.mxu0 %v257
    %341 = vmatprep.subr.bf16.mxu0 0
    %342 = vmatpush1.bf16.msra.mxu0 %v258
    %343 = vmatprep.subr.bf16.mxu0 0
    %344 = vmatpush1.bf16.msra.mxu0 %v259
    %345 = vmatprep.subr.bf16.mxu0 0
    %346 = vmatpush1.bf16.msra.mxu0 %v260
    %347 = vmatprep.subr.bf16.mxu0 0
    %348 = vmatpush1.bf16.msra.mxu0 %v261
    %349 = vmatprep.mubr.bf16.mxu0 %v47
    %350 = vmatmul.mubr.bf16.gmra.mrb[0].mxu0 %v46
    %v351 = vpop.f32.mrb[0].mxu0
    %v352 = vadd.f32 %v118, %v351
    %v353 = vpop.f32.mrb[0].mxu0
    %v354 = vpop.f32.mrb[0].mxu0
    %v355 = vpop.f32.mrb[0].mxu0
    %356 = vdwg.mxu0
    %357 = vmatprep.subr.bf16.mxu0 0
    %358 = vmatpush1.bf16.msra.mxu0 %v262
    %359 = vmatprep.subr.bf16.mxu0 0
    %360 = vmatpush1.bf16.msra.mxu0 %v263
    %361 = vmatprep.subr.bf16.mxu0 0
    %362 = vmatpush1.bf16.msra.mxu0 %v264
    %363 = vmatprep.subr.bf16.mxu0 0
    %364 = vmatpush1.bf16.msra.mxu0 %v265
    %365 = vmatprep.subr.bf16.mxu0 0
    %366 = vmatpush1.bf16.msra.mxu0 %v266
    %367 = vmatprep.subr.bf16.mxu0 0
    %368 = vmatpush1.bf16.msra.mxu0 %v267
    %369 = vmatprep.subr.bf16.mxu0 0
    %370 = vmatpush1.bf16.msra.mxu0 %v268
    %371 = vmatprep.subr.bf16.mxu0 0
    %372 = vmatpush1.bf16.msra.mxu0 %v269
    %373 = vmatprep.subr.bf16.mxu0 0
    %374 = vmatpush1.bf16.msra.mxu0 %v270
    %375 = vmatprep.subr.bf16.mxu0 0
    %376 = vmatpush1.bf16.msra.mxu0 %v271
    %377 = vmatprep.subr.bf16.mxu0 0
    %378 = vmatpush1.bf16.msra.mxu0 %v272
    %379 = vmatprep.subr.bf16.mxu0 0
    %380 = vmatpush1.bf16.msra.mxu0 %v273
    %381 = vmatprep.subr.bf16.mxu0 0
    %382 = vmatpush1.bf16.msra.mxu0 %v274
    %383 = vmatprep.subr.bf16.mxu0 0
    %384 = vmatpush1.bf16.msra.mxu0 %v275
    %385 = vmatprep.subr.bf16.mxu0 0
    %386 = vmatpush1.bf16.msra.mxu0 %v276
    %387 = vmatprep.subr.bf16.mxu0 0
    %388 = vmatpush1.bf16.msra.mxu0 %v315
    %389 = vmatprep.mubr.bf16.mxu0 %v311
    %390 = vmatmul.mubr.bf16.gmra.mrb[0].mxu0 %v48
    %v391 = vpop.f32.mrb[0].mxu0
    %v392 = vadd.f32 %v352, %v391
    %v393 = vpop.f32.mrb[0].mxu0
    %v394 = vpop.f32.mrb[0].mxu0
    %v395 = vpop.f32.mrb[0].mxu0
    %396 = vdwg.mxu0
    %397 = vst [vmem:[#allocation7] sm:$0xff] %v392
    // Predicated region
    $region22: #{fiannaca2018_head.1} parent=1 // pred_check
      _
    $region23: #{fiannaca2018_head.1} parent=1 // pred_check_branch
      %399 = sbr.rel (0) target = $region25
    $region24: #{fiannaca2018_head.1} parent=1 // pred_region
      %s401 = ssub.s32 128, 128
      %402 = vsyncadd [#allocation4], %s401
      %s404 = sshll.u32 [#allocation7], 4
      %s405 = int_to_ptr.vmem [resolvable:$true] %s404
      %407 = dma.vmem_to_hbm [thread:$0]  %s405, 128, %s3, [#allocation4]
    $region25: #{fiannaca2018_head.1} parent=1 // pred_fallthru
      _
    // Predicated region
    $region26: #{fiannaca2018_head.1} parent=1 // pred_check
      _
    $region27: #{fiannaca2018_head.1} parent=1 // pred_check_branch
      %409 = sbr.rel (0) target = $region29
    $region28: #{fiannaca2018_head.1} parent=1 // pred_region
      %410 = dma.done [#allocation4], 128
    $region29: #{fiannaca2018_head.1} parent=1 // pred_fallthru
      _
    %411 = vsyncpa [#allocation3], 1
    %412 = vsyncpa [#allocation6], 1
    %413 = vsyncpa [#allocation4], 1

</llo_original>
